<compile_context>
chip_gen: v7x
topology: tpu7x:2x2x1
jax: 0.10.0
libtpu: 0.0.40
codegen_flags: <defaults>
</compile_context>

<pallas_src>
import jax
import jax.numpy as jnp
from jax import lax
from jax.experimental import pallas as pl
from jax.experimental.pallas import tpu as pltpu


_VMEM_LIMIT_BYTES = 32 * 1024 * 1024   # explicit: > v5e 16 MiB default, < v7x 64 MiB physical
_TILE_BUDGET_BYTES = 20 * 1024 * 1024  # data budget; leaves headroom under the limit


def _pick_tile(n: int, d: int, itemsize: int) -> int:
    """Largest square tile (multiple of 128) whose working set fits the budget."""
    n_aligned = max(128, ((n + 127) // 128) * 128)
    for t in (512, 256, 128):
        if t > n_aligned:
            continue
        emb_bytes = 2 * 2 * t * d * itemsize      # two embedding tiles, double-buffered
        side_bytes = 2 * 2 * 2 * t * 4            # norms + labels (row & col), double-buffered
        interm_bytes = 4 * t * t * 4              # (t, t) f32 temporaries (gram/dist/mask/masked)
        scratch_bytes = 8 * t * 4                 # resident partial-sum accumulator
        if emb_bytes + side_bytes + interm_bytes + scratch_bytes <= _TILE_BUDGET_BYTES:
            return t
    # TODO(synk): tile the contraction (D) axis when even a 128-row embedding
    # tile exceeds the VMEM budget (very large hidden dims).
    return 128


def _online_sim_loss_kernel(bi_ref, bj_ref,                       # scalar prefetch (SMEM)
                            ei_ref, ej_ref, ni_ref, nj_ref,       # inputs
                            li_ref, lj_ref,
                            out_ref,                               # output (1, 1) f32
                            acc_ref):                              # VMEM scratch (8, t) f32
    s = pl.program_id(0)
    bi = bi_ref[s]
    bj = bj_ref[s]

    # Zero the resident accumulator on the first grid step.
    @pl.when(s == 0)
    def _():
        acc_ref[...] = jnp.zeros_like(acc_ref)

    ei = ei_ref[...]                                   # (t, D), native dtype (f32/bf16)
    ej = ej_ref[...]                                   # (t, D)
    tm = ei.shape[0]
    tn = ej.shape[0]

    # Gram block on the MXU (contract over D, no explicit transpose), f32 acc.
    g = lax.dot_general(
        ei, ej,
        dimension_numbers=(((1,), (1,)), ((), ())),
        preferred_element_type=jnp.float32)                        # (t, t)

    # ||ei - ej||^2 via precomputed row norms; clamp tiny negatives from
    # cancellation.  NOTE: Gram-identity distances in f32 can deviate ~1e-3
    # relative for ill-conditioned (near-duplicate / huge-norm) embeddings.
    dist = jnp.maximum(ni_ref[...] + nj_ref[...] - 2.0 * g, 0.0)   # (t, t)

    same = li_ref[...] == lj_ref[...]                              # (t, t) bool

    def _accumulate(mask):
        masked = jnp.where(mask, dist, 0.0)
        # Layout-preserving reshape (sublane split) + leading-axis VALU reduce:
        # no per-step cross-lane (XLU) reduce, no 1-lane read-modify-write.
        acc_ref[...] += masked.reshape(tm // 8, 8, tn).sum(axis=0)

    # Diagonal block pair: only pairs with global row < col count.
    @pl.when(bi == bj)
    def _():
        r = lax.broadcasted_iota(jnp.int32, (tm, tn), 0)
        c = lax.broadcasted_iota(jnp.int32, (tm, tn), 1)
        _accumulate(jnp.logical_and(same, r < c))

    # Off-diagonal (bj > bi): every same-label pair counts exactly once.
    @pl.when(bi != bj)
    def _():
        _accumulate(same)

    # Single scalar reduce, once, on the last grid step.
    @pl.when(s == pl.num_programs(0) - 1)
    def _():
        out_ref[...] = jnp.sum(acc_ref[...]).reshape(1, 1)


def online_sim_loss(embeddings, target):
    """embeddings: (N, D) float (f32/bf16), target: (N,) int labels -> f32 loss."""
    n, d = embeddings.shape
    itemsize = jnp.dtype(embeddings.dtype).itemsize
    t = _pick_tile(n, d, itemsize)
    n_pad = ((n + t - 1) // t) * t

    labels = target.astype(jnp.int32)
    emb = embeddings
    if n_pad != n:
        pad = n_pad - n
        emb = jnp.pad(embeddings, ((0, pad), (0, 0)))
        # Sentinel labels: distinct from every real label and from each other,
        # so padded rows never form a (fake) positive pair.
        sentinels = jnp.max(labels) + 1 + jnp.arange(pad, dtype=jnp.int32)
        labels = jnp.concatenate([labels, sentinels])

    # Per-row squared norms computed once (O(N*D)) in f32, outside the kernel.
    norms = jnp.sum(emb.astype(jnp.float32) * emb.astype(jnp.float32), axis=-1)
    norms_col = norms.reshape(n_pad, 1)
    norms_row = norms.reshape(1, n_pad)
    lab_col = labels.reshape(n_pad, 1)
    lab_row = labels.reshape(1, n_pad)

    # Triangular block enumeration: (bi, bj) with bj >= bi  ->  T*(T+1)/2 steps.
    nb = n_pad // t
    bi_list, bj_list = [], []
    for a in range(nb):
        for b in range(a, nb):
            bi_list.append(a)
            bj_list.append(b)
    bi_arr = jnp.asarray(bi_list, dtype=jnp.int32)
    bj_arr = jnp.asarray(bj_list, dtype=jnp.int32)
    nsteps = len(bi_list)

    # TODO(synk): on v7x (2 TCs/chip), split the triangular step list across a
    # leading "parallel" grid axis with per-core partial outputs summed in the
    # wrapper; with a single resident accumulator the grid must stay sequential.
    total = pl.pallas_call(
        _online_sim_loss_kernel,
        out_shape=jax.ShapeDtypeStruct((1, 1), jnp.float32),
        grid_spec=pltpu.PrefetchScalarGridSpec(
            num_scalar_prefetch=2,
            grid=(nsteps,),
            in_specs=[
                pl.BlockSpec((t, d), lambda s, bi, bj: (bi[s], 0)),   # e_i tile
                pl.BlockSpec((t, d), lambda s, bi, bj: (bj[s], 0)),   # e_j tile
                pl.BlockSpec((t, 1), lambda s, bi, bj: (bi[s], 0)),   # |e_i|^2 (col)
                pl.BlockSpec((1, t), lambda s, bi, bj: (0, bj[s])),   # |e_j|^2 (row)
                pl.BlockSpec((t, 1), lambda s, bi, bj: (bi[s], 0)),   # labels (col)
                pl.BlockSpec((1, t), lambda s, bi, bj: (0, bj[s])),   # labels (row)
            ],
            out_specs=pl.BlockSpec((1, 1), lambda s, bi, bj: (0, 0)),
            scratch_shapes=[pltpu.VMEM((8, t), jnp.float32)],
        ),
        compiler_params=pltpu.CompilerParams(
            dimension_semantics=("arbitrary",),
            vmem_limit_bytes=_VMEM_LIMIT_BYTES),
    )(bi_arr, bj_arr, emb, emb, norms_col, norms_row, lab_col, lab_row)

    # Positive-pair count depends only on the (real) labels -> outside the
    # kernel hot path.  NOTE: zero positive pairs -> NaN, same as the PyTorch
    # reference (mean over an empty tensor).
    same_full = (target[:, None] == target[None, :]).astype(jnp.float32)
    n_pos = (jnp.sum(same_full) - jnp.float32(n)) * 0.5
    return total[0, 0] / n_pos


def _reference_loss(embeddings, target):
    """Pure-JAX reference matching the PyTorch forward."""
    n = embeddings.shape[0]
    e = embeddings.astype(jnp.float32)
    diff = e[:, None, :] - e[None, :, :]
    dist = jnp.sum(diff * diff, axis=-1)
    same = target[:, None] == target[None, :]
    iu = jnp.triu(jnp.ones((n, n), bool), k=1)
    mask = (same & iu).astype(jnp.float32)
    return jnp.sum(dist * mask) / jnp.sum(mask)


if __name__ == "__main__":
    key = jax.random.PRNGKey(0)
    N, D = 8, 32  # batch of 8 embeddings, hidden dim 32
    embeddings = jax.random.normal(key, (N, D), dtype=jnp.float32)
    # Deterministic labels guaranteeing positive pairs exist.
    target = jnp.array([0, 1, 0, 1, 2, 2, 3, 3], dtype=jnp.int32)

    loss = online_sim_loss(embeddings, target)
    loss = jax.block_until_ready(loss)

    ref = _reference_loss(embeddings, target)
    assert jnp.allclose(loss, ref, rtol=1e-4, atol=1e-4), (loss, ref)

    print("KERNEL_OK")
</pallas_src>

<mosaic_0001>
module attributes {stable_mosaic.version = 11 : i64} {
  func.func @_online_sim_loss_kernel(%arg0: i32, %arg1: memref<1xi32, #tpu.memory_space<smem>>, %arg2: memref<1xi32, #tpu.memory_space<smem>>, %arg3: memref<128x32xf32, #tpu.memory_space<vmem>>, %arg4: memref<128x32xf32, #tpu.memory_space<vmem>>, %arg5: memref<128x1xf32, #tpu.memory_space<vmem>>, %arg6: memref<1x128xf32, #tpu.memory_space<vmem>>, %arg7: memref<128x1xi32, #tpu.memory_space<vmem>>, %arg8: memref<1x128xi32, #tpu.memory_space<vmem>>, %arg9: memref<1x1xf32, #tpu.memory_space<vmem>>, %arg10: memref<8x128xf32, #tpu.memory_space<vmem>>) attributes {dimension_semantics = [#tpu.dimension_semantics<arbitrary>], iteration_bounds = array<i64: 1>, scalar_prefetch = 2 : i64, scratch_operands = 1 : i64, tpu.core_type = #tpu.core_type<tc>, window_params = [{transform_indices = @transform_0, window_bounds = array<i64: 128, 32>}, {transform_indices = @transform_1, window_bounds = array<i64: 128, 32>}, {transform_indices = @transform_2, window_bounds = array<i64: 128, 1>}, {transform_indices = @transform_3, window_bounds = array<i64: 1, 128>}, {transform_indices = @transform_4, window_bounds = array<i64: 128, 1>}, {transform_indices = @transform_5, window_bounds = array<i64: 1, 128>}, {pipeline_mode = #tpu.pipeline_mode<synchronous>, transform_indices = @transform_6, window_bounds = array<i64: 1, 1>}]} {
    %0 = arith.index_cast %arg0 : i32 to index
    %1 = memref.load %arg1[%0] : memref<1xi32, #tpu.memory_space<smem>>
    %2 = arith.index_cast %arg0 : i32 to index
    %3 = memref.load %arg2[%2] : memref<1xi32, #tpu.memory_space<smem>>
    %c0_i32 = arith.constant 0 : i32
    %4 = arith.cmpi eq, %arg0, %c0_i32 : i32
    %5 = arith.extui %4 : i1 to i32
    %c0_i32_0 = arith.constant 0 : i32
    %6 = arith.cmpi ne, %5, %c0_i32_0 : i32
    scf.if %6 {
      %cst_18 = arith.constant 0.000000e+00 : f32
      %34 = vector.broadcast %cst_18 : f32 to vector<8x128xf32>
      %c0_19 = arith.constant 0 : index
      %c0_20 = arith.constant 0 : index
      %35 = vector.load %arg10[%c0_19, %c0_20] : memref<8x128xf32, #tpu.memory_space<vmem>>, vector<8x128xf32>
      tpu.vector_store %arg10[%c0_19, %c0_20], %34 {strides = array<i32>} : memref<8x128xf32, #tpu.memory_space<vmem>>, vector<8x128xf32>,
    } else {
    }
    %c0 = arith.constant 0 : index
    %c0_1 = arith.constant 0 : index
    %7 = vector.load %arg3[%c0, %c0_1] : memref<128x32xf32, #tpu.memory_space<vmem>>, vector<128x32xf32>
    %c0_2 = arith.constant 0 : index
    %c0_3 = arith.constant 0 : index
    %8 = vector.load %arg4[%c0_2, %c0_3] : memref<128x32xf32, #tpu.memory_space<vmem>>, vector<128x32xf32>
    %cst = arith.constant dense<0.000000e+00> : vector<128x128xf32>
    %9 = tpu.matmul %7, %8, %cst {dimension_numbers = #tpu.dot_dimension_numbers<[1], [1], [0], [0], [0, 0, 1, 0], [], []>} : vector<128x32xf32>, vector<128x32xf32>, vector<128x128xf32> -> vector<128x128xf32>
    %c0_4 = arith.constant 0 : index
    %c0_5 = arith.constant 0 : index
    %10 = vector.load %arg5[%c0_4, %c0_5] : memref<128x1xf32, #tpu.memory_space<vmem>>, vector<128x1xf32>
    %c0_6 = arith.constant 0 : index
    %c0_7 = arith.constant 0 : index
    %11 = vector.load %arg6[%c0_6, %c0_7] : memref<1x128xf32, #tpu.memory_space<vmem>>, vector<1x128xf32>
    %12 = vector.broadcast %10 : vector<128x1xf32> to vector<128x128xf32>
    %13 = vector.broadcast %11 : vector<1x128xf32> to vector<128x128xf32>
    %14 = arith.addf %12, %13 : vector<128x128xf32>
    %cst_8 = arith.constant 2.000000e+00 : f32
    %15 = vector.broadcast %cst_8 : f32 to vector<128x128xf32>
    %16 = arith.mulf %15, %9 : vector<128x128xf32>
    %17 = arith.subf %14, %16 : vector<128x128xf32>
    %cst_9 = arith.constant 0.000000e+00 : f32
    %18 = vector.broadcast %cst_9 : f32 to vector<128x128xf32>
    %19 = arith.maximumf %17, %18 : vector<128x128xf32>
    %c0_10 = arith.constant 0 : index
    %c0_11 = arith.constant 0 : index
    %20 = vector.load %arg7[%c0_10, %c0_11] : memref<128x1xi32, #tpu.memory_space<vmem>>, vector<128x1xi32>
    %c0_12 = arith.constant 0 : index
    %c0_13 = arith.constant 0 : index
    %21 = vector.load %arg8[%c0_12, %c0_13] : memref<1x128xi32, #tpu.memory_space<vmem>>, vector<1x128xi32>
    %22 = vector.broadcast %20 : vector<128x1xi32> to vector<128x128xi32>
    %23 = vector.broadcast %21 : vector<1x128xi32> to vector<128x128xi32>
    %24 = arith.cmpi eq, %22, %23 : vector<128x128xi32>
    %25 = arith.cmpi eq, %1, %3 : i32
    %26 = arith.extui %25 : i1 to i32
    %c0_i32_14 = arith.constant 0 : i32
    %27 = arith.cmpi ne, %26, %c0_i32_14 : i32
    scf.if %27 {
      %34 = tpu.iota {dimensions = array<i32: 0>} : vector<128x128xi32>
      %35 = tpu.iota {dimensions = array<i32: 1>} : vector<128x128xi32>
      %36 = arith.cmpi slt, %34, %35 : vector<128x128xi32>
      %37 = arith.andi %24, %36 : vector<128x128xi1>
      %cst_18 = arith.constant 0.000000e+00 : f32
      %38 = vector.broadcast %cst_18 : f32 to vector<128x128xf32>
      %39 = arith.select %37, %19, %38 : vector<128x128xi1>, vector<128x128xf32>
      %c0_19 = arith.constant 0 : index
      %c0_20 = arith.constant 0 : index
      %40 = vector.load %arg10[%c0_19, %c0_20] : memref<8x128xf32, #tpu.memory_space<vmem>>, vector<8x128xf32>
      %41 = vector.shape_cast %39 : vector<128x128xf32> to vector<16x8x128xf32>
      %cst_21 = arith.constant dense<0.000000e+00> : vector<8x128xf32>
      %42 = vector.multi_reduction <add>, %41, %cst_21 [0] : vector<16x8x128xf32> to vector<8x128xf32>
      %43 = arith.addf %40, %42 : vector<8x128xf32>
      %c0_22 = arith.constant 0 : index
      %c0_23 = arith.constant 0 : index
      %44 = vector.load %arg10[%c0_22, %c0_23] : memref<8x128xf32, #tpu.memory_space<vmem>>, vector<8x128xf32>
      tpu.vector_store %arg10[%c0_22, %c0_23], %43 {strides = array<i32>} : memref<8x128xf32, #tpu.memory_space<vmem>>, vector<8x128xf32>,
    } else {
    }
    %28 = arith.cmpi ne, %1, %3 : i32
    %29 = arith.extui %28 : i1 to i32
    %c0_i32_15 = arith.constant 0 : i32
    %30 = arith.cmpi ne, %29, %c0_i32_15 : i32
    scf.if %30 {
      %cst_18 = arith.constant 0.000000e+00 : f32
      %34 = vector.broadcast %cst_18 : f32 to vector<128x128xf32>
      %35 = arith.select %24, %19, %34 : vector<128x128xi1>, vector<128x128xf32>
      %c0_19 = arith.constant 0 : index
      %c0_20 = arith.constant 0 : index
      %36 = vector.load %arg10[%c0_19, %c0_20] : memref<8x128xf32, #tpu.memory_space<vmem>>, vector<8x128xf32>
      %37 = vector.shape_cast %35 : vector<128x128xf32> to vector<16x8x128xf32>
      %cst_21 = arith.constant dense<0.000000e+00> : vector<8x128xf32>
      %38 = vector.multi_reduction <add>, %37, %cst_21 [0] : vector<16x8x128xf32> to vector<8x128xf32>
      %39 = arith.addf %36, %38 : vector<8x128xf32>
      %c0_22 = arith.constant 0 : index
      %c0_23 = arith.constant 0 : index
      %40 = vector.load %arg10[%c0_22, %c0_23] : memref<8x128xf32, #tpu.memory_space<vmem>>, vector<8x128xf32>
      tpu.vector_store %arg10[%c0_22, %c0_23], %39 {strides = array<i32>} : memref<8x128xf32, #tpu.memory_space<vmem>>, vector<8x128xf32>,
    } else {
    }
    %c0_i32_16 = arith.constant 0 : i32
    %31 = arith.cmpi eq, %arg0, %c0_i32_16 : i32
    %32 = arith.extui %31 : i1 to i32
    %c0_i32_17 = arith.constant 0 : i32
    %33 = arith.cmpi ne, %32, %c0_i32_17 : i32
    scf.if %33 {
      %c0_18 = arith.constant 0 : index
      %c0_19 = arith.constant 0 : index
      %34 = vector.load %arg10[%c0_18, %c0_19] : memref<8x128xf32, #tpu.memory_space<vmem>>, vector<8x128xf32>
      %35 = vector.shape_cast %34 : vector<8x128xf32> to vector<1x8x128xf32>
      %cst_20 = arith.constant dense<0.000000e+00> : vector<1xf32>
      %36 = vector.multi_reduction <add>, %35, %cst_20 [1, 2] : vector<1x8x128xf32> to vector<1xf32>
      %37 = vector.shape_cast %36 : vector<1xf32> to vector<1x1x1xf32>
      %38 = vector.extract %37[0, 0, 0] : f32 from vector<1x1x1xf32>
      %39 = vector.broadcast %38 : f32 to vector<1x1xf32>
      %c0_21 = arith.constant 0 : index
      %c0_22 = arith.constant 0 : index
      %40 = vector.load %arg9[%c0_21, %c0_22] : memref<1x1xf32, #tpu.memory_space<vmem>>, vector<1x1xf32>
      tpu.vector_store %arg9[%c0_21, %c0_22], %39 {strides = array<i32>} : memref<1x1xf32, #tpu.memory_space<vmem>>, vector<1x1xf32>,
    } else {
    }
    return
  }
  func.func @transform_0(%arg0: i32, %arg1: memref<1xi32, #tpu.memory_space<smem>>, %arg2: memref<1xi32, #tpu.memory_space<smem>>) -> (i32, i32) {
    %0 = arith.index_cast %arg0 : i32 to index
    %1 = memref.load %arg1[%0] : memref<1xi32, #tpu.memory_space<smem>>
    %c0_i32 = arith.constant 0 : i32
    %c0_i32_0 = arith.constant 0 : i32
    return %1, %c0_i32 : i32, i32
  }
  func.func @transform_1(%arg0: i32, %arg1: memref<1xi32, #tpu.memory_space<smem>>, %arg2: memref<1xi32, #tpu.memory_space<smem>>) -> (i32, i32) {
    %0 = arith.index_cast %arg0 : i32 to index
    %1 = memref.load %arg2[%0] : memref<1xi32, #tpu.memory_space<smem>>
    %c0_i32 = arith.constant 0 : i32
    %c0_i32_0 = arith.constant 0 : i32
    return %1, %c0_i32 : i32, i32
  }
  func.func @transform_2(%arg0: i32, %arg1: memref<1xi32, #tpu.memory_space<smem>>, %arg2: memref<1xi32, #tpu.memory_space<smem>>) -> (i32, i32) {
    %0 = arith.index_cast %arg0 : i32 to index
    %1 = memref.load %arg1[%0] : memref<1xi32, #tpu.memory_space<smem>>
    %c0_i32 = arith.constant 0 : i32
    %c0_i32_0 = arith.constant 0 : i32
    return %1, %c0_i32 : i32, i32
  }
  func.func @transform_3(%arg0: i32, %arg1: memref<1xi32, #tpu.memory_space<smem>>, %arg2: memref<1xi32, #tpu.memory_space<smem>>) -> (i32, i32) {
    %0 = arith.index_cast %arg0 : i32 to index
    %1 = memref.load %arg2[%0] : memref<1xi32, #tpu.memory_space<smem>>
    %c0_i32 = arith.constant 0 : i32
    %c0_i32_0 = arith.constant 0 : i32
    return %c0_i32, %1 : i32, i32
  }
  func.func @transform_4(%arg0: i32, %arg1: memref<1xi32, #tpu.memory_space<smem>>, %arg2: memref<1xi32, #tpu.memory_space<smem>>) -> (i32, i32) {
    %0 = arith.index_cast %arg0 : i32 to index
    %1 = memref.load %arg1[%0] : memref<1xi32, #tpu.memory_space<smem>>
    %c0_i32 = arith.constant 0 : i32
    %c0_i32_0 = arith.constant 0 : i32
    return %1, %c0_i32 : i32, i32
  }
  func.func @transform_5(%arg0: i32, %arg1: memref<1xi32, #tpu.memory_space<smem>>, %arg2: memref<1xi32, #tpu.memory_space<smem>>) -> (i32, i32) {
    %0 = arith.index_cast %arg0 : i32 to index
    %1 = memref.load %arg2[%0] : memref<1xi32, #tpu.memory_space<smem>>
    %c0_i32 = arith.constant 0 : i32
    %c0_i32_0 = arith.constant 0 : i32
    return %c0_i32, %1 : i32, i32
  }
  func.func @transform_6(%arg0: i32, %arg1: memref<1xi32, #tpu.memory_space<smem>>, %arg2: memref<1xi32, #tpu.memory_space<smem>>) -> (i32, i32) {
    %c0_i32 = arith.constant 0 : i32
    %c0_i32_0 = arith.constant 0 : i32
    %c0_i32_1 = arith.constant 0 : i32
    return %c0_i32, %c0_i32_0 : i32, i32
  }
}

</mosaic_0001>

<llo_original>
// kernel: tpu_custom_call.1
$region0: #{tpu_custom_call.1}
  #allocation0 [shape = 'u32[]', space=smem, size = 0x4, offset = 0x4, fixed_abs, tag = 'smem constant byte address 0x4 - core index']
  #allocation1 [shape = 'u32[144,128]{1,0:T(1,128)}', space=vmem, size = 0x12000, scoped, tag = 'internal scratch']
  #allocation2 [shape = 'f32[8,128]{1,0:T(8,128)}', space=vmem, size = 0x1000, scoped, tag = 'scratch operand']
  #allocation3 [shape = 's32[1]{0}', space=sflag, size = 0x4, scoped, tag = 'scoped memory for tpu_custom_call.1']
  #allocation4 [shape = 's32[1]{0:T(128)S(6)}', space=smem, size = 0x200, scoped, tag = 'prefetched SMEM operand 0']
  #allocation5 [shape = 's32[1]{0:T(128)S(6)}', space=smem, size = 0x200, scoped, tag = 'prefetched SMEM operand 1']
  %s0 = inlined_call_operand.<no memory space> [shape: s32[1], index: 0, kind: input, shape index: {}]
  %s1 = inlined_call_operand.<no memory space> [shape: s32[1], index: 1, kind: input, shape index: {}]
  %s2 = inlined_call_operand.vmem [shape: f32[128,32], index: 2, kind: input, shape index: {}]
  %s3 = inlined_call_operand.vmem [shape: f32[128,32], index: 3, kind: input, shape index: {}]
  %s4 = inlined_call_operand.vmem [shape: f32[128,1], index: 4, kind: input, shape index: {}]
  %s5 = inlined_call_operand.vmem [shape: f32[1,128], index: 5, kind: input, shape index: {}]
  %s6 = inlined_call_operand.vmem [shape: s32[128,1], index: 6, kind: input, shape index: {}]
  %s7 = inlined_call_operand.vmem [shape: s32[1,128], index: 7, kind: input, shape index: {}]
  %s8 = inlined_call_operand.hbm [shape: f32[1,1], index: 8, kind: output, shape index: {}]
  %s9 = sld [smem:[#allocation0]]
  $region50: #{tpu_custom_call.1} parent=0
    _
  %s11 = ssub.s32 1, %s9
  %s12 = scalar_select 0, %s11, %s9
  %13 = sst [smem:[#allocation4]] %s0
  %14 = sst [smem:[#allocation5]] %s1
  $region1: #{tpu_custom_call.1} parent=0
    #allocation6 [shape = 'u8[512]{0}', space=vmem, size = 0x400, scoped, tag = 'output window, operand 0, single buffered']
    #allocation7 [shape = 's32[1]{0}', space=sflag, size = 0x4, scoped, tag = 'scoped memory for tpu_custom_call.1']
    %15 = vsyncpa [#allocation7], 0
    // Predicated region
    $region2: #{tpu_custom_call.1} parent=1 // pred_check
      _
    $region3: #{tpu_custom_call.1} parent=1 // pred_check_branch
      %17 = sbr.rel (0) target = $region5
    $region4: #{tpu_custom_call.1} parent=1 // pred_region
      %s18 = sld [smem:[#allocation4]]
      %s19 = smul.u32 16, %s18
      %p20 = scmp.lt.s32.totalorder %s19, 15
      %s21 = scalar_select %p20, %s19, 15
      %s22 = smul.addr %s21, 8
      %s23 = scalar_lea.vmem %s2, %s22
      %s24 = sld [smem:[#allocation4]]
      %s25 = smul.u32 16, %s24
    $region5: #{tpu_custom_call.1} parent=1 // pred_fallthru
      _
    // Predicated region
    $region6: #{tpu_custom_call.1} parent=1 // pred_check
      _
    $region7: #{tpu_custom_call.1} parent=1 // pred_check_branch
      %27 = sbr.rel (0) target = $region9
    $region8: #{tpu_custom_call.1} parent=1 // pred_region
      %s28 = sld [smem:[#allocation5]]
      %s29 = smul.u32 16, %s28
      %p30 = scmp.lt.s32.totalorder %s29, 15
      %s31 = scalar_select %p30, %s29, 15
      %s32 = smul.addr %s31, 8
      %s33 = scalar_lea.vmem %s3, %s32
      %s34 = sld [smem:[#allocation5]]
      %s35 = smul.u32 16, %s34
    $region9: #{tpu_custom_call.1} parent=1 // pred_fallthru
      _
    // Predicated region
    $region10: #{tpu_custom_call.1} parent=1 // pred_check
      _
    $region11: #{tpu_custom_call.1} parent=1 // pred_check_branch
      %37 = sbr.rel (0) target = $region13
    $region12: #{tpu_custom_call.1} parent=1 // pred_region
      %s38 = sld [smem:[#allocation4]]
      %s39 = smul.u32 16, %s38
      %p40 = scmp.lt.s32.totalorder %s39, 15
      %s41 = scalar_select %p40, %s39, 15
      %s42 = smul.addr %s41, 8
      %s43 = scalar_lea.vmem %s4, %s42
      %s44 = sld [smem:[#allocation4]]
      %s45 = smul.u32 16, %s44
    $region13: #{tpu_custom_call.1} parent=1 // pred_fallthru
      _
    // Predicated region
    $region14: #{tpu_custom_call.1} parent=1 // pred_check
      _
    $region15: #{tpu_custom_call.1} parent=1 // pred_check_branch
      %47 = sbr.rel (0) target = $region17
    $region16: #{tpu_custom_call.1} parent=1 // pred_region
      %s48 = sld [smem:[#allocation5]]
      %p49 = scmp.lt.s32.totalorder %s48, 0
      %s50 = scalar_select %p49, %s48, 0
      %s51 = scalar_lea.vmem %s5, %s50
      %s52 = sld [smem:[#allocation5]]
    $region17: #{tpu_custom_call.1} parent=1 // pred_fallthru
      _
    // Predicated region
    $region18: #{tpu_custom_call.1} parent=1 // pred_check
      _
    $region19: #{tpu_custom_call.1} parent=1 // pred_check_branch
      %54 = sbr.rel (0) target = $region21
    $region20: #{tpu_custom_call.1} parent=1 // pred_region
      %s55 = sld [smem:[#allocation4]]
      %s56 = smul.u32 16, %s55
      %p57 = scmp.lt.s32.totalorder %s56, 15
      %s58 = scalar_select %p57, %s56, 15
      %s59 = smul.addr %s58, 8
      %s60 = scalar_lea.vmem %s6, %s59
      %s61 = sld [smem:[#allocation4]]
      %s62 = smul.u32 16, %s61
    $region21: #{tpu_custom_call.1} parent=1 // pred_fallthru
      _
    // Predicated region
    $region22: #{tpu_custom_call.1} parent=1 // pred_check
      _
    $region23: #{tpu_custom_call.1} parent=1 // pred_check_branch
      %64 = sbr.rel (0) target = $region25
    $region24: #{tpu_custom_call.1} parent=1 // pred_region
      %s65 = sld [smem:[#allocation5]]
      %p66 = scmp.lt.s32.totalorder %s65, 0
      %s67 = scalar_select %p66, %s65, 0
      %s68 = scalar_lea.vmem %s7, %s67
      %s69 = sld [smem:[#allocation5]]
    $region25: #{tpu_custom_call.1} parent=1 // pred_fallthru
      _
    %s70 = sld [smem:[#allocation4]]
    %s71 = smul.u32 16, %s70
    %p72 = scmp.lt.s32.totalorder %s71, 15
    %s73 = scalar_select %p72, %s71, 15
    %s74 = smul.addr %s73, 8
    %s75 = scalar_lea.vmem %s2, %s74
    %s76 = sld [smem:[#allocation5]]
    %s77 = smul.u32 16, %s76
    %p78 = scmp.lt.s32.totalorder %s77, 15
    %s79 = scalar_select %p78, %s77, 15
    %s80 = smul.addr %s79, 8
    %s81 = scalar_lea.vmem %s3, %s80
    %s82 = sld [smem:[#allocation4]]
    %s83 = smul.u32 16, %s82
    %p84 = scmp.lt.s32.totalorder %s83, 15
    %s85 = scalar_select %p84, %s83, 15
    %s86 = smul.addr %s85, 8
    %s87 = scalar_lea.vmem %s4, %s86
    %s88 = sld [smem:[#allocation5]]
    %p89 = scmp.lt.s32.totalorder %s88, 0
    %s90 = scalar_select %p89, %s88, 0
    %s91 = scalar_lea.vmem %s5, %s90
    %s92 = sld [smem:[#allocation4]]
    %s93 = smul.u32 16, %s92
    %p94 = scmp.lt.s32.totalorder %s93, 15
    %s95 = scalar_select %p94, %s93, 15
    %s96 = smul.addr %s95, 8
    %s97 = scalar_lea.vmem %s6, %s96
    %s98 = sld [smem:[#allocation5]]
    %p99 = scmp.lt.s32.totalorder %s98, 0
    %s100 = scalar_select %p99, %s98, 0
    %s101 = scalar_lea.vmem %s7, %s100
    %s102 = sld [smem:[#allocation4]]
    %s103 = smul.u32 16, %s102
    %p104 = scmp.lt.s32.totalorder %s103, 15
    %s105 = scalar_select %p104, %s103, 15
    %s106 = smul.addr %s105, 8
    %s107 = scalar_lea.vmem %s2, %s106
    %s108 = sld [smem:[#allocation4]]
    %s109 = smul.u32 16, %s108
    %s110 = sld [smem:[#allocation5]]
    %s111 = smul.u32 16, %s110
    %p112 = scmp.lt.s32.totalorder %s111, 15
    %s113 = scalar_select %p112, %s111, 15
    %s114 = smul.addr %s113, 8
    %s115 = scalar_lea.vmem %s3, %s114
    %s116 = sld [smem:[#allocation5]]
    %s117 = smul.u32 16, %s116
    %s118 = sld [smem:[#allocation4]]
    %s119 = smul.u32 16, %s118
    %p120 = scmp.lt.s32.totalorder %s119, 15
    %s121 = scalar_select %p120, %s119, 15
    %s122 = smul.addr %s121, 8
    %s123 = scalar_lea.vmem %s4, %s122
    %s124 = sld [smem:[#allocation4]]
    %s125 = smul.u32 16, %s124
    %s126 = sld [smem:[#allocation5]]
    %p127 = scmp.lt.s32.totalorder %s126, 0
    %s128 = scalar_select %p127, %s126, 0
    %s129 = scalar_lea.vmem %s5, %s128
    %s130 = sld [smem:[#allocation5]]
    %s131 = sld [smem:[#allocation4]]
    %s132 = smul.u32 16, %s131
    %p133 = scmp.lt.s32.totalorder %s132, 15
    %s134 = scalar_select %p133, %s132, 15
    %s135 = smul.addr %s134, 8
    %s136 = scalar_lea.vmem %s6, %s135
    %s137 = sld [smem:[#allocation4]]
    %s138 = smul.u32 16, %s137
    %s139 = sld [smem:[#allocation5]]
    %p140 = scmp.lt.s32.totalorder %s139, 0
    %s141 = scalar_select %p140, %s139, 0
    %s142 = scalar_lea.vmem %s7, %s141
    %s143 = sld [smem:[#allocation5]]
    %s144 = sld [smem:[#allocation4]]
    %s145 = sld [smem:[#allocation5]]
    %p146 = scmp.eq.s32.totalorder 0, 0
    // Predicated region
    $region26: #{tpu_custom_call.1} parent=1 // pred_check
      %p147 = pneg %p146
    $region27: #{tpu_custom_call.1} parent=1 // pred_check_branch
      %149 = sbr.rel (%p147) target = $region29
    $region28: #{tpu_custom_call.1} parent=1 // pred_region
      %150 = vst [vmem:[#allocation2] sm:$0xff] 0.0
    $region29: #{tpu_custom_call.1} parent=1 // pred_fallthru
      _
    %v151 = vld [vmem:[%s107] sm:$0xff]
    %v152 = vld [vmem:[%s107 + $0x8] sm:$0xff]
    %v153 = vld [vmem:[%s107 + $0x10] sm:$0xff]
    %v154 = vld [vmem:[%s107 + $0x18] sm:$0xff]
    %v155 = vld [vmem:[%s107 + $0x20] sm:$0xff]
    %v156 = vld [vmem:[%s107 + $0x28] sm:$0xff]
    %v157 = vld [vmem:[%s107 + $0x30] sm:$0xff]
    %v158 = vld [vmem:[%s107 + $0x38] sm:$0xff]
    %v159 = vld [vmem:[%s107 + $0x40] sm:$0xff]
    %v160 = vld [vmem:[%s107 + $0x48] sm:$0xff]
    %v161 = vld [vmem:[%s107 + $0x50] sm:$0xff]
    %v162 = vld [vmem:[%s107 + $0x58] sm:$0xff]
    %v163 = vld [vmem:[%s107 + $0x60] sm:$0xff]
    %v164 = vld [vmem:[%s107 + $0x68] sm:$0xff]
    %v165 = vld [vmem:[%s107 + $0x70] sm:$0xff]
    %v166 = vld [vmem:[%s107 + $0x78] sm:$0xff]
    %v167 = vld [vmem:[%s115] sm:$0xff]
    %v168 = vld [vmem:[%s115 + $0x8] sm:$0xff]
    %v169 = vld [vmem:[%s115 + $0x10] sm:$0xff]
    %v170 = vld [vmem:[%s115 + $0x18] sm:$0xff]
    %v171 = vld [vmem:[%s115 + $0x20] sm:$0xff]
    %v172 = vld [vmem:[%s115 + $0x28] sm:$0xff]
    %v173 = vld [vmem:[%s115 + $0x30] sm:$0xff]
    %v174 = vld [vmem:[%s115 + $0x38] sm:$0xff]
    %v175 = vld [vmem:[%s115 + $0x40] sm:$0xff]
    %v176 = vld [vmem:[%s115 + $0x48] sm:$0xff]
    %v177 = vld [vmem:[%s115 + $0x50] sm:$0xff]
    %v178 = vld [vmem:[%s115 + $0x58] sm:$0xff]
    %v179 = vld [vmem:[%s115 + $0x60] sm:$0xff]
    %v180 = vld [vmem:[%s115 + $0x68] sm:$0xff]
    %v181 = vld [vmem:[%s115 + $0x70] sm:$0xff]
    %v182 = vld [vmem:[%s115 + $0x78] sm:$0xff]
    %vm183 = vcmask 261120
    %v185 = vsel %vm183, %v151, 0
    %v188 = vsel %vm183, %v152, 0
    %v191 = vsel %vm183, %v153, 0
    %v194 = vsel %vm183, %v154, 0
    %v197 = vsel %vm183, %v155, 0
    %v200 = vsel %vm183, %v156, 0
    %v203 = vsel %vm183, %v157, 0
    %v206 = vsel %vm183, %v158, 0
    %v209 = vsel %vm183, %v159, 0
    %v212 = vsel %vm183, %v160, 0
    %v215 = vsel %vm183, %v161, 0
    %v218 = vsel %vm183, %v162, 0
    %v221 = vsel %vm183, %v163, 0
    %v224 = vsel %vm183, %v164, 0
    %v227 = vsel %vm183, %v165, 0
    %v230 = vsel %vm183, %v166, 0
    %v233 = vsel %vm183, %v167, 0
    %v236 = vsel %vm183, %v168, 0
    %v239 = vsel %vm183, %v169, 0
    %v242 = vsel %vm183, %v170, 0
    %v245 = vsel %vm183, %v171, 0
    %v248 = vsel %vm183, %v172, 0
    %v251 = vsel %vm183, %v173, 0
    %v254 = vsel %vm183, %v174, 0
    %v257 = vsel %vm183, %v175, 0
    %v260 = vsel %vm183, %v176, 0
    %v263 = vsel %vm183, %v177, 0
    %v266 = vsel %vm183, %v178, 0
    %v269 = vsel %vm183, %v179, 0
    %v272 = vsel %vm183, %v180, 0
    %v275 = vsel %vm183, %v181, 0
    %v278 = vsel %vm183, %v182, 0
    %280 = vmatprep.subr.mxu0 0.0
    %281 = vmatpush1.xpose.msra.mxu0 %v233
    %282 = vmatprep.subr.mxu0 0.0
    %283 = vmatpush1.xpose.msra.mxu0 %v236
    %284 = vmatprep.subr.mxu0 0.0
    %285 = vmatpush1.xpose.msra.mxu0 %v239
    %286 = vmatprep.subr.mxu0 0.0
    %287 = vmatpush1.xpose.msra.mxu0 %v242
    %288 = vmatprep.subr.mxu0 0.0
    %289 = vmatpush1.xpose.msra.mxu0 %v245
    %290 = vmatprep.subr.mxu0 0.0
    %291 = vmatpush1.xpose.msra.mxu0 %v248
    %292 = vmatprep.subr.mxu0 0.0
    %293 = vmatpush1.xpose.msra.mxu0 %v251
    %294 = vmatprep.subr.mxu0 0.0
    %295 = vmatpush1.xpose.msra.mxu0 %v254
    %296 = vmatprep.subr.mxu0 0.0
    %297 = vmatpush1.xpose.msra.mxu0 %v257
    %298 = vmatprep.subr.mxu0 0.0
    %299 = vmatpush1.xpose.msra.mxu0 %v260
    %300 = vmatprep.subr.mxu0 0.0
    %301 = vmatpush1.xpose.msra.mxu0 %v263
    %302 = vmatprep.subr.mxu0 0.0
    %303 = vmatpush1.xpose.msra.mxu0 %v266
    %304 = vmatprep.subr.mxu0 0.0
    %305 = vmatpush1.xpose.msra.mxu0 %v269
    %306 = vmatprep.subr.mxu0 0.0
    %307 = vmatpush1.xpose.msra.mxu0 %v272
    %308 = vmatprep.subr.mxu0 0.0
    %309 = vmatpush1.xpose.msra.mxu0 %v275
    %310 = vmatprep.subr.mxu0 0.0
    %311 = vmatpush1.xpose.msra.mxu0 %v278
    %312 = vmatprep.subr.mxu0 0.0
    %313 = vmatpush1.xpose.msra.mxu0 0.0
    %314 = vmatprep.subr.mxu0 0.0
    %315 = vmatpush1.xpose.msra.mxu0 0.0
    %316 = vmatprep.subr.mxu0 0.0
    %317 = vmatpush1.xpose.msra.mxu0 0.0
    %318 = vmatprep.subr.mxu0 0.0
    %319 = vmatpush1.xpose.msra.mxu0 0.0
    %320 = vmatprep.subr.mxu0 0.0
    %321 = vmatpush1.xpose.msra.mxu0 0.0
    %322 = vmatprep.subr.mxu0 0.0
    %323 = vmatpush1.xpose.msra.mxu0 0.0
    %324 = vmatprep.subr.mxu0 0.0
    %325 = vmatpush1.xpose.msra.mxu0 0.0
    %326 = vmatprep.subr.mxu0 0.0
    %327 = vmatpush1.xpose.msra.mxu0 0.0
    %328 = vmatprep.subr.mxu0 0.0
    %329 = vmatpush1.xpose.msra.mxu0 0.0
    %330 = vmatprep.subr.mxu0 0.0
    %331 = vmatpush1.xpose.msra.mxu0 0.0
    %332 = vmatprep.subr.mxu0 0.0
    %333 = vmatpush1.xpose.msra.mxu0 0.0
    %334 = vmatprep.subr.mxu0 0.0
    %335 = vmatpush1.xpose.msra.mxu0 0.0
    %336 = vmatprep.subr.mxu0 0.0
    %337 = vmatpush1.xpose.msra.mxu0 0.0
    %338 = vmatprep.subr.mxu0 0.0
    %339 = vmatpush1.xpose.msra.mxu0 0.0
    %340 = vmatprep.subr.mxu0 0.0
    %341 = vmatpush1.xpose.msra.mxu0 0.0
    %342 = vmatprep.subr.mxu0 0.0
    %343 = vmatpush1.xpose.msra.mxu0 0.0
    %344 = vmatprep.mubr.f32.mxu0 0.0
    %345 = vmatmul.mubr.f32.gmra.mrb[0].mxu0 %v185
    %v346 = vpop.f32.mrb[0].mxu0
    %v347 = vadd.f32 0.0, %v346
    %v348 = vpop.f32.mrb[0].mxu0
    %349 = vmatprep.mubr.f32.mxu0 0.0
    %350 = vmatmul.mubr.f32.gmra.mrb[0].mxu0 %v188
    %v351 = vpop.f32.mrb[0].mxu0
    %v352 = vadd.f32 0.0, %v351
    %v353 = vpop.f32.mrb[0].mxu0
    %354 = vmatprep.mubr.f32.mxu0 0.0
    %355 = vmatmul.mubr.f32.gmra.mrb[0].mxu0 %v191
    %v356 = vpop.f32.mrb[0].mxu0
    %v357 = vadd.f32 0.0, %v356
    %v358 = vpop.f32.mrb[0].mxu0
    %359 = vmatprep.mubr.f32.mxu0 0.0
    %360 = vmatmul.mubr.f32.gmra.mrb[0].mxu0 %v194
    %v361 = vpop.f32.mrb[0].mxu0
    %v362 = vadd.f32 0.0, %v361
    %v363 = vpop.f32.mrb[0].mxu0
    %364 = vmatprep.mubr.f32.mxu0 0.0
    %365 = vmatmul.mubr.f32.gmra.mrb[0].mxu0 %v197
    %v366 = vpop.f32.mrb[0].mxu0
    %v367 = vadd.f32 0.0, %v366
    %v368 = vpop.f32.mrb[0].mxu0
    %369 = vmatprep.mubr.f32.mxu0 0.0
    %370 = vmatmul.mubr.f32.gmra.mrb[0].mxu0 %v200
    %v371 = vpop.f32.mrb[0].mxu0
    %v372 = vadd.f32 0.0, %v371
    %v373 = vpop.f32.mrb[0].mxu0
    %374 = vmatprep.mubr.f32.mxu0 0.0
    %375 = vmatmul.mubr.f32.gmra.mrb[0].mxu0 %v203
    %v376 = vpop.f32.mrb[0].mxu0
    %v377 = vadd.f32 0.0, %v376
    %v378 = vpop.f32.mrb[0].mxu0
    %379 = vmatprep.mubr.f32.mxu0 0.0
    %380 = vmatmul.mubr.f32.gmra.mrb[0].mxu0 %v206
    %v381 = vpop.f32.mrb[0].mxu0
    %v382 = vadd.f32 0.0, %v381
    %v383 = vpop.f32.mrb[0].mxu0
    %384 = vmatprep.mubr.f32.mxu0 0.0
    %385 = vmatmul.mubr.f32.gmra.mrb[0].mxu0 %v209
    %v386 = vpop.f32.mrb[0].mxu0
    %v387 = vadd.f32 0.0, %v386
    %v388 = vpop.f32.mrb[0].mxu0
    %389 = vmatprep.mubr.f32.mxu0 0.0
    %390 = vmatmul.mubr.f32.gmra.mrb[0].mxu0 %v212
    %v391 = vpop.f32.mrb[0].mxu0
    %v392 = vadd.f32 0.0, %v391
    %v393 = vpop.f32.mrb[0].mxu0
    %394 = vmatprep.mubr.f32.mxu0 0.0
    %395 = vmatmul.mubr.f32.gmra.mrb[0].mxu0 %v215
    %v396 = vpop.f32.mrb[0].mxu0
    %v397 = vadd.f32 0.0, %v396
    %v398 = vpop.f32.mrb[0].mxu0
    %399 = vmatprep.mubr.f32.mxu0 0.0
    %400 = vmatmul.mubr.f32.gmra.mrb[0].mxu0 %v218
    %v401 = vpop.f32.mrb[0].mxu0
    %v402 = vadd.f32 0.0, %v401
    %v403 = vpop.f32.mrb[0].mxu0
    %404 = vmatprep.mubr.f32.mxu0 0.0
    %405 = vmatmul.mubr.f32.gmra.mrb[0].mxu0 %v221
    %v406 = vpop.f32.mrb[0].mxu0
    %v407 = vadd.f32 0.0, %v406
    %v408 = vpop.f32.mrb[0].mxu0
    %409 = vmatprep.mubr.f32.mxu0 0.0
    %410 = vmatmul.mubr.f32.gmra.mrb[0].mxu0 %v224
    %v411 = vpop.f32.mrb[0].mxu0
    %v412 = vadd.f32 0.0, %v411
    %v413 = vpop.f32.mrb[0].mxu0
    %414 = vmatprep.mubr.f32.mxu0 0.0
    %415 = vmatmul.mubr.f32.gmra.mrb[0].mxu0 %v227
    %v416 = vpop.f32.mrb[0].mxu0
    %v417 = vadd.f32 0.0, %v416
    %v418 = vpop.f32.mrb[0].mxu0
    %419 = vmatprep.mubr.f32.mxu0 0.0
    %420 = vmatmul.mubr.f32.gmra.mrb[0].mxu0 %v230
    %v421 = vpop.f32.mrb[0].mxu0
    %v422 = vadd.f32 0.0, %v421
    %v423 = vpop.f32.mrb[0].mxu0
    %424 = vdwg.mxu0
    %v425 = vld [vmem:[%s123] sm:$0xff]
    %v426 = vld [vmem:[%s123 + $0x8] sm:$0xff]
    %v427 = vld [vmem:[%s123 + $0x10] sm:$0xff]
    %v428 = vld [vmem:[%s123 + $0x18] sm:$0xff]
    %v429 = vld [vmem:[%s123 + $0x20] sm:$0xff]
    %v430 = vld [vmem:[%s123 + $0x28] sm:$0xff]
    %v431 = vld [vmem:[%s123 + $0x30] sm:$0xff]
    %v432 = vld [vmem:[%s123 + $0x38] sm:$0xff]
    %v433 = vld [vmem:[%s123 + $0x40] sm:$0xff]
    %v434 = vld [vmem:[%s123 + $0x48] sm:$0xff]
    %v435 = vld [vmem:[%s123 + $0x50] sm:$0xff]
    %v436 = vld [vmem:[%s123 + $0x58] sm:$0xff]
    %v437 = vld [vmem:[%s123 + $0x60] sm:$0xff]
    %v438 = vld [vmem:[%s123 + $0x68] sm:$0xff]
    %v439 = vld [vmem:[%s123 + $0x70] sm:$0xff]
    %v440 = vld [vmem:[%s123 + $0x78] sm:$0xff]
    %v441 = vld [vmem:[%s129] sm:$0x1]
    %443 = vset.pattern.permute.xlu0 0
    %444 = vperm.xlu0 %443, %v425
    %v445 = vpop.permute.xlu0 %444
    %448 = vset.pattern.permute.xlu0 0
    %449 = vperm.xlu0 %448, %v426
    %v450 = vpop.permute.xlu0 %449
    %453 = vset.pattern.permute.xlu0 0
    %454 = vperm.xlu0 %453, %v427
    %v455 = vpop.permute.xlu0 %454
    %458 = vset.pattern.permute.xlu0 0
    %459 = vperm.xlu0 %458, %v428
    %v460 = vpop.permute.xlu0 %459
    %463 = vset.pattern.permute.xlu0 0
    %464 = vperm.xlu0 %463, %v429
    %v465 = vpop.permute.xlu0 %464
    %468 = vset.pattern.permute.xlu0 0
    %469 = vperm.xlu0 %468, %v430
    %v470 = vpop.permute.xlu0 %469
    %473 = vset.pattern.permute.xlu0 0
    %474 = vperm.xlu0 %473, %v431
    %v475 = vpop.permute.xlu0 %474
    %478 = vset.pattern.permute.xlu0 0
    %479 = vperm.xlu0 %478, %v432
    %v480 = vpop.permute.xlu0 %479
    %483 = vset.pattern.permute.xlu0 0
    %484 = vperm.xlu0 %483, %v433
    %v485 = vpop.permute.xlu0 %484
    %488 = vset.pattern.permute.xlu0 0
    %489 = vperm.xlu0 %488, %v434
    %v490 = vpop.permute.xlu0 %489
    %493 = vset.pattern.permute.xlu0 0
    %494 = vperm.xlu0 %493, %v435
    %v495 = vpop.permute.xlu0 %494
    %498 = vset.pattern.permute.xlu0 0
    %499 = vperm.xlu0 %498, %v436
    %v500 = vpop.permute.xlu0 %499
    %503 = vset.pattern.permute.xlu0 0
    %504 = vperm.xlu0 %503, %v437
    %v505 = vpop.permute.xlu0 %504
    %508 = vset.pattern.permute.xlu0 0
    %509 = vperm.xlu0 %508, %v438
    %v510 = vpop.permute.xlu0 %509
    %513 = vset.pattern.permute.xlu0 0
    %514 = vperm.xlu0 %513, %v439
    %v515 = vpop.permute.xlu0 %514
    %518 = vset.pattern.permute.xlu0 0
    %519 = vperm.xlu0 %518, %v440
    %v520 = vpop.permute.xlu0 %519
    %v523 = vlaneseq
    %v524 = vshrl.u32 %v523, 7
    %v525 = vsub.s32 0, %v524
    %v526 = vrot.slane %v441, %v525
    %v528 = vadd.f32 %v445, %v526
    %v529 = vadd.f32 %v450, %v526
    %v530 = vadd.f32 %v455, %v526
    %v531 = vadd.f32 %v460, %v526
    %v532 = vadd.f32 %v465, %v526
    %v533 = vadd.f32 %v470, %v526
    %v534 = vadd.f32 %v475, %v526
    %v535 = vadd.f32 %v480, %v526
    %v536 = vadd.f32 %v485, %v526
    %v537 = vadd.f32 %v490, %v526
    %v538 = vadd.f32 %v495, %v526
    %v539 = vadd.f32 %v500, %v526
    %v540 = vadd.f32 %v505, %v526
    %v541 = vadd.f32 %v510, %v526
    %v542 = vadd.f32 %v515, %v526
    %v543 = vadd.f32 %v520, %v526
    %v544 = vmul.f32 %v347, 2.0
    %v545 = vmul.f32 %v352, 2.0
    %v546 = vmul.f32 %v357, 2.0
    %v547 = vmul.f32 %v362, 2.0
    %v548 = vmul.f32 %v367, 2.0
    %v549 = vmul.f32 %v372, 2.0
    %v550 = vmul.f32 %v377, 2.0
    %v551 = vmul.f32 %v382, 2.0
    %v552 = vmul.f32 %v387, 2.0
    %v553 = vmul.f32 %v392, 2.0
    %v554 = vmul.f32 %v397, 2.0
    %v555 = vmul.f32 %v402, 2.0
    %v556 = vmul.f32 %v407, 2.0
    %v557 = vmul.f32 %v412, 2.0
    %v558 = vmul.f32 %v417, 2.0
    %v559 = vmul.f32 %v422, 2.0
    %v560 = vsub.f32 %v528, %v544
    %v561 = vsub.f32 %v529, %v545
    %v562 = vsub.f32 %v530, %v546
    %v563 = vsub.f32 %v531, %v547
    %v564 = vsub.f32 %v532, %v548
    %v565 = vsub.f32 %v533, %v549
    %v566 = vsub.f32 %v534, %v550
    %v567 = vsub.f32 %v535, %v551
    %v568 = vsub.f32 %v536, %v552
    %v569 = vsub.f32 %v537, %v553
    %v570 = vsub.f32 %v538, %v554
    %v571 = vsub.f32 %v539, %v555
    %v572 = vsub.f32 %v540, %v556
    %v573 = vsub.f32 %v541, %v557
    %v574 = vsub.f32 %v542, %v558
    %v575 = vsub.f32 %v543, %v559
    %v576 = vmax.f32 %v560, 0.0
    %v577 = vmax.f32 %v561, 0.0
    %v578 = vmax.f32 %v562, 0.0
    %v579 = vmax.f32 %v563, 0.0
    %v580 = vmax.f32 %v564, 0.0
    %v581 = vmax.f32 %v565, 0.0
    %v582 = vmax.f32 %v566, 0.0
    %v583 = vmax.f32 %v567, 0.0
    %v584 = vmax.f32 %v568, 0.0
    %v585 = vmax.f32 %v569, 0.0
    %v586 = vmax.f32 %v570, 0.0
    %v587 = vmax.f32 %v571, 0.0
    %v588 = vmax.f32 %v572, 0.0
    %v589 = vmax.f32 %v573, 0.0
    %v590 = vmax.f32 %v574, 0.0
    %v591 = vmax.f32 %v575, 0.0
    %v592 = vld [vmem:[%s136] sm:$0xff]
    %v593 = vld [vmem:[%s136 + $0x8] sm:$0xff]
    %v594 = vld [vmem:[%s136 + $0x10] sm:$0xff]
    %v595 = vld [vmem:[%s136 + $0x18] sm:$0xff]
    %v596 = vld [vmem:[%s136 + $0x20] sm:$0xff]
    %v597 = vld [vmem:[%s136 + $0x28] sm:$0xff]
    %v598 = vld [vmem:[%s136 + $0x30] sm:$0xff]
    %v599 = vld [vmem:[%s136 + $0x38] sm:$0xff]
    %v600 = vld [vmem:[%s136 + $0x40] sm:$0xff]
    %v601 = vld [vmem:[%s136 + $0x48] sm:$0xff]
    %v602 = vld [vmem:[%s136 + $0x50] sm:$0xff]
    %v603 = vld [vmem:[%s136 + $0x58] sm:$0xff]
    %v604 = vld [vmem:[%s136 + $0x60] sm:$0xff]
    %v605 = vld [vmem:[%s136 + $0x68] sm:$0xff]
    %v606 = vld [vmem:[%s136 + $0x70] sm:$0xff]
    %v607 = vld [vmem:[%s136 + $0x78] sm:$0xff]
    %v608 = vld [vmem:[%s142] sm:$0x1]
    %609 = vset.pattern.permute.xlu0 0
    %610 = vperm.xlu0 %609, %v592
    %v611 = vpop.permute.xlu0 %610
    %612 = vset.pattern.permute.xlu0 0
    %613 = vperm.xlu0 %612, %v593
    %v614 = vpop.permute.xlu0 %613
    %615 = vset.pattern.permute.xlu0 0
    %616 = vperm.xlu0 %615, %v594
    %v617 = vpop.permute.xlu0 %616
    %618 = vset.pattern.permute.xlu0 0
    %619 = vperm.xlu0 %618, %v595
    %v620 = vpop.permute.xlu0 %619
    %621 = vset.pattern.permute.xlu0 0
    %622 = vperm.xlu0 %621, %v596
    %v623 = vpop.permute.xlu0 %622
    %624 = vset.pattern.permute.xlu0 0
    %625 = vperm.xlu0 %624, %v597
    %v626 = vpop.permute.xlu0 %625
    %627 = vset.pattern.permute.xlu0 0
    %628 = vperm.xlu0 %627, %v598
    %v629 = vpop.permute.xlu0 %628
    %630 = vset.pattern.permute.xlu0 0
    %631 = vperm.xlu0 %630, %v599
    %v632 = vpop.permute.xlu0 %631
    %633 = vset.pattern.permute.xlu0 0
    %634 = vperm.xlu0 %633, %v600
    %v635 = vpop.permute.xlu0 %634
    %636 = vset.pattern.permute.xlu0 0
    %637 = vperm.xlu0 %636, %v601
    %v638 = vpop.permute.xlu0 %637
    %639 = vset.pattern.permute.xlu0 0
    %640 = vperm.xlu0 %639, %v602
    %v641 = vpop.permute.xlu0 %640
    %642 = vset.pattern.permute.xlu0 0
    %643 = vperm.xlu0 %642, %v603
    %v644 = vpop.permute.xlu0 %643
    %645 = vset.pattern.permute.xlu0 0
    %646 = vperm.xlu0 %645, %v604
    %v647 = vpop.permute.xlu0 %646
    %648 = vset.pattern.permute.xlu0 0
    %649 = vperm.xlu0 %648, %v605
    %v650 = vpop.permute.xlu0 %649
    %651 = vset.pattern.permute.xlu0 0
    %652 = vperm.xlu0 %651, %v606
    %v653 = vpop.permute.xlu0 %652
    %654 = vset.pattern.permute.xlu0 0
    %655 = vperm.xlu0 %654, %v607
    %v656 = vpop.permute.xlu0 %655
    %v657 = vlaneseq
    %v658 = vshrl.u32 %v657, 7
    %v659 = vsub.s32 0, %v658
    %v660 = vrot.slane %v608, %v659
    %vm661 = vcmp.eq.s32.totalorder %v611, %v660
    %vm662 = vcmp.eq.s32.totalorder %v614, %v660
    %vm663 = vcmp.eq.s32.totalorder %v617, %v660
    %vm664 = vcmp.eq.s32.totalorder %v620, %v660
    %vm665 = vcmp.eq.s32.totalorder %v623, %v660
    %vm666 = vcmp.eq.s32.totalorder %v626, %v660
    %vm667 = vcmp.eq.s32.totalorder %v629, %v660
    %vm668 = vcmp.eq.s32.totalorder %v632, %v660
    %vm669 = vcmp.eq.s32.totalorder %v635, %v660
    %vm670 = vcmp.eq.s32.totalorder %v638, %v660
    %vm671 = vcmp.eq.s32.totalorder %v641, %v660
    %vm672 = vcmp.eq.s32.totalorder %v644, %v660
    %vm673 = vcmp.eq.s32.totalorder %v647, %v660
    %vm674 = vcmp.eq.s32.totalorder %v650, %v660
    %vm675 = vcmp.eq.s32.totalorder %v653, %v660
    %vm676 = vcmp.eq.s32.totalorder %v656, %v660
    %p677 = scmp.eq.s32.totalorder %s144, %s145
    // Predicated region
    $region30: #{tpu_custom_call.1} parent=1 // pred_check
      %p678 = pneg %p677
    $region31: #{tpu_custom_call.1} parent=1 // pred_check_branch
      %680 = sbr.rel (%p678) target = $region33
    $region32: #{tpu_custom_call.1} parent=1 // pred_region
      %v681 = vlaneseq
      %v682 = vshrl.u32 %v681, 7
      %v683 = vadd.s32 %v682, 8
      %v684 = vadd.s32 %v682, 16
      %v685 = vadd.s32 %v682, 24
      %v686 = vadd.s32 %v682, 32
      %v687 = vadd.s32 %v682, 40
      %v688 = vadd.s32 %v682, 48
      %v689 = vadd.s32 %v682, 56
      %v690 = vadd.s32 %v682, 64
      %v691 = vadd.s32 %v682, 72
      %v692 = vadd.s32 %v682, 80
      %v693 = vadd.s32 %v682, 88
      %v694 = vadd.s32 %v682, 96
      %v695 = vadd.s32 %v682, 104
      %v696 = vadd.s32 %v682, 112
      %v697 = vadd.s32 %v682, 120
      %v698 = vlaneseq
      %v699 = vand.u32 %v698, 127
      %vm700 = vcmp.lt.s32.totalorder %v682, %v699
      %vm701 = vcmp.lt.s32.totalorder %v683, %v699
      %vm702 = vcmp.lt.s32.totalorder %v684, %v699
      %vm703 = vcmp.lt.s32.totalorder %v685, %v699
      %vm704 = vcmp.lt.s32.totalorder %v686, %v699
      %vm705 = vcmp.lt.s32.totalorder %v687, %v699
      %vm706 = vcmp.lt.s32.totalorder %v688, %v699
      %vm707 = vcmp.lt.s32.totalorder %v689, %v699
      %vm708 = vcmp.lt.s32.totalorder %v690, %v699
      %vm709 = vcmp.lt.s32.totalorder %v691, %v699
      %vm710 = vcmp.lt.s32.totalorder %v692, %v699
      %vm711 = vcmp.lt.s32.totalorder %v693, %v699
      %vm712 = vcmp.lt.s32.totalorder %v694, %v699
      %vm713 = vcmp.lt.s32.totalorder %v695, %v699
      %vm714 = vcmp.lt.s32.totalorder %v696, %v699
      %vm715 = vcmp.lt.s32.totalorder %v697, %v699
      %vm716 = vmand %vm661, %vm700
      %vm717 = vmand %vm662, %vm701
      %vm718 = vmand %vm663, %vm702
      %vm719 = vmand %vm664, %vm703
      %vm720 = vmand %vm665, %vm704
      %vm721 = vmand %vm666, %vm705
      %vm722 = vmand %vm667, %vm706
      %vm723 = vmand %vm668, %vm707
      %vm724 = vmand %vm669, %vm708
      %vm725 = vmand %vm670, %vm709
      %vm726 = vmand %vm671, %vm710
      %vm727 = vmand %vm672, %vm711
      %vm728 = vmand %vm673, %vm712
      %vm729 = vmand %vm674, %vm713
      %vm730 = vmand %vm675, %vm714
      %vm731 = vmand %vm676, %vm715
      %v732 = vsel %vm716, %v576, 0.0
      %v733 = vsel %vm717, %v577, 0.0
      %v734 = vsel %vm718, %v578, 0.0
      %v735 = vsel %vm719, %v579, 0.0
      %v736 = vsel %vm720, %v580, 0.0
      %v737 = vsel %vm721, %v581, 0.0
      %v738 = vsel %vm722, %v582, 0.0
      %v739 = vsel %vm723, %v583, 0.0
      %v740 = vsel %vm724, %v584, 0.0
      %v741 = vsel %vm725, %v585, 0.0
      %v742 = vsel %vm726, %v586, 0.0
      %v743 = vsel %vm727, %v587, 0.0
      %v744 = vsel %vm728, %v588, 0.0
      %v745 = vsel %vm729, %v589, 0.0
      %v746 = vsel %vm730, %v590, 0.0
      %v747 = vsel %vm731, %v591, 0.0
      %v748 = vld [vmem:[#allocation2] sm:$0xff]
      %v749 = vadd.f32 %v732, %v733
      %v750 = vadd.f32 %v749, %v734
      %v751 = vadd.f32 %v750, %v735
      %v752 = vadd.f32 %v751, %v736
      %v753 = vadd.f32 %v752, %v737
      %v754 = vadd.f32 %v753, %v738
      %v755 = vadd.f32 %v754, %v739
      %v756 = vadd.f32 %v755, %v740
      %v757 = vadd.f32 %v756, %v741
      %v758 = vadd.f32 %v757, %v742
      %v759 = vadd.f32 %v758, %v743
      %v760 = vadd.f32 %v759, %v744
      %v761 = vadd.f32 %v760, %v745
      %v762 = vadd.f32 %v761, %v746
      %v763 = vadd.f32 %v762, %v747
      %v764 = vadd.f32 %v748, %v763
      %765 = vst [vmem:[#allocation2] sm:$0xff] %v764
    $region33: #{tpu_custom_call.1} parent=1 // pred_fallthru
      _
    %p766 = scmp.ne.s32.totalorder %s144, %s145
    // Predicated region
    $region34: #{tpu_custom_call.1} parent=1 // pred_check
      %p767 = pneg %p766
    $region35: #{tpu_custom_call.1} parent=1 // pred_check_branch
      %769 = sbr.rel (%p767) target = $region37
    $region36: #{tpu_custom_call.1} parent=1 // pred_region
      %v770 = vsel %vm661, %v576, 0.0
      %v771 = vsel %vm662, %v577, 0.0
      %v772 = vsel %vm663, %v578, 0.0
      %v773 = vsel %vm664, %v579, 0.0
      %v774 = vsel %vm665, %v580, 0.0
      %v775 = vsel %vm666, %v581, 0.0
      %v776 = vsel %vm667, %v582, 0.0
      %v777 = vsel %vm668, %v583, 0.0
      %v778 = vsel %vm669, %v584, 0.0
      %v779 = vsel %vm670, %v585, 0.0
      %v780 = vsel %vm671, %v586, 0.0
      %v781 = vsel %vm672, %v587, 0.0
      %v782 = vsel %vm673, %v588, 0.0
      %v783 = vsel %vm674, %v589, 0.0
      %v784 = vsel %vm675, %v590, 0.0
      %v785 = vsel %vm676, %v591, 0.0
      %v786 = vld [vmem:[#allocation2] sm:$0xff]
      %v787 = vadd.f32 %v770, %v771
      %v788 = vadd.f32 %v787, %v772
      %v789 = vadd.f32 %v788, %v773
      %v790 = vadd.f32 %v789, %v774
      %v791 = vadd.f32 %v790, %v775
      %v792 = vadd.f32 %v791, %v776
      %v793 = vadd.f32 %v792, %v777
      %v794 = vadd.f32 %v793, %v778
      %v795 = vadd.f32 %v794, %v779
      %v796 = vadd.f32 %v795, %v780
      %v797 = vadd.f32 %v796, %v781
      %v798 = vadd.f32 %v797, %v782
      %v799 = vadd.f32 %v798, %v783
      %v800 = vadd.f32 %v799, %v784
      %v801 = vadd.f32 %v800, %v785
      %v802 = vadd.f32 %v786, %v801
      %803 = vst [vmem:[#allocation2] sm:$0xff] %v802
    $region37: #{tpu_custom_call.1} parent=1 // pred_fallthru
      _
    // Predicated region
    $region38: #{tpu_custom_call.1} parent=1 // pred_check
      %p804 = pneg %p146
    $region39: #{tpu_custom_call.1} parent=1 // pred_check_branch
      %806 = sbr.rel (%p804) target = $region41
    $region40: #{tpu_custom_call.1} parent=1 // pred_region
      %v807 = vld [vmem:[#allocation2] sm:$0xff]
      %808 = vadd.xlane.f32.xlu0 %v807
      %v809 = vpop.xlane.xlu0 %808
      %v810 = vrot.slane %v809, 4
      %v811 = vadd.f32 %v809, %v810
      %v812 = vrot.slane %v811, 2
      %v813 = vadd.f32 %v811, %v812
      %v814 = vrot.slane %v813, 1
      %v815 = vadd.f32 %v813, %v814
      %s816 = vtos %v815
      %v817 = vstv %s816
      %vm818 = vcmask 0
      %819 = vst.msk [vmem:[#allocation6] sm:$0x1] %vm818, %v817
    $region41: #{tpu_custom_call.1} parent=1 // pred_fallthru
      _
    // Predicated region
    $region42: #{tpu_custom_call.1} parent=1 // pred_check
      _
    $region43: #{tpu_custom_call.1} parent=1 // pred_check_branch
      %821 = sbr.rel (0) target = $region45
    $region44: #{tpu_custom_call.1} parent=1 // pred_region
      %s823 = ssub.s32 16, 16
      %824 = vsyncadd [#allocation7], %s823
      %s826 = sshll.u32 [#allocation6], 4
      %s827 = int_to_ptr.vmem [resolvable:$true] %s826
      %829 = dma.vmem_to_hbm [thread:$0]  %s827, 16, %s8, [#allocation7]
    $region45: #{tpu_custom_call.1} parent=1 // pred_fallthru
      _
    // Predicated region
    $region46: #{tpu_custom_call.1} parent=1 // pred_check
      _
    $region47: #{tpu_custom_call.1} parent=1 // pred_check_branch
      %831 = sbr.rel (0) target = $region49
    $region48: #{tpu_custom_call.1} parent=1 // pred_region
      %832 = dma.done [#allocation7], 16
    $region49: #{tpu_custom_call.1} parent=1 // pred_fallthru
      _
    %833 = vsyncpa [#allocation7], 1

</llo_original>
